<compile_context>
chip_gen: v5e
topology: v5e:2x2
jax: 0.10.0
libtpu: 0.0.40
codegen_flags: <defaults>
</compile_context>

<pallas_src>
import functools

import jax
import jax.numpy as jnp
from jax.experimental import pallas as pl
from jax.experimental.pallas import tpu as pltpu

_LANE = 128  # vreg lane width / MXU-friendly padding target


def _mlp_kernel(x_ref, w1_ref, b1_ref, w2_ref, b2_ref, o_ref):
    # fc1: (TB, Kp) bf16 @ (Kp, Hp) bf16 -> f32 accumulate; bias add in f32.
    h = jnp.dot(x_ref[...], w1_ref[...], preferred_element_type=jnp.float32)
    h = h + b1_ref[...]
    # ReLU (VPU).
    h = jnp.maximum(h, 0.0)
    # fc2: recast activations to bf16 so the MXU runs at native rate.
    out = jnp.dot(h.astype(w2_ref.dtype), w2_ref[...],
                  preferred_element_type=jnp.float32)
    out = out + b2_ref[...]
    o_ref[...] = out.astype(o_ref.dtype)


def _round_up(n, m):
    return ((n + m - 1) // m) * m


@functools.partial(jax.jit, static_argnames=("block_b",))
def feed_forward_net(x, w1, b1, w2, b2, *, block_b=128):
    """relu(x @ w1 + b1) @ w2 + b2 as a single batch-tiled Pallas kernel.

    x : (B, In)   w1: (In, H)   b1: (H,)/(1,H)   w2: (H, C)   b2: (C,)/(1,C)
    Returns (B, C) in x.dtype (f32 accumulation inside the kernel).
    """
    B, In = x.shape
    H = w1.shape[1]
    C = w2.shape[1]
    b1 = b1.reshape(1, -1)
    b2 = b2.reshape(1, -1)

    # ---- wrapper-side layout prep -----------------------------------------
    # Pad contraction dims (In, H) and output dim (C) up to the 128-lane vreg
    # width; pad batch up to a multiple of the batch tile. Zero padding is
    # semantically inert (zero rows/cols of the weights, zero bias entries).
    Kp = _round_up(max(In, 1), _LANE)
    Hp = _round_up(max(H, 1), _LANE)
    Cp = _round_up(max(C, 1), _LANE)
    TB = block_b
    Bp = _round_up(B, TB)

    out_dtype = x.dtype
    x_p = jnp.pad(x, ((0, Bp - B), (0, Kp - In))).astype(jnp.bfloat16)
    w1_p = jnp.pad(w1, ((0, Kp - In), (0, Hp - H))).astype(jnp.bfloat16)
    w2_p = jnp.pad(w2, ((0, Hp - H), (0, Cp - C))).astype(jnp.bfloat16)
    b1_p = jnp.pad(b1, ((0, 0), (0, Hp - H))).astype(jnp.float32)
    b2_p = jnp.pad(b2, ((0, 0), (0, Cp - C))).astype(jnp.float32)

    grid = (Bp // TB,)

    out_p = pl.pallas_call(
        _mlp_kernel,
        out_shape=jax.ShapeDtypeStruct((Bp, Cp), out_dtype),
        grid=grid,
        in_specs=[
            # x: one batch tile per grid step (auto double-buffered).
            pl.BlockSpec((TB, Kp), lambda i: (i, 0)),
            # Weights/biases: constant block -> stay VMEM-resident.
            pl.BlockSpec((Kp, Hp), lambda i: (0, 0)),
            pl.BlockSpec((1, Hp), lambda i: (0, 0)),
            pl.BlockSpec((Hp, Cp), lambda i: (0, 0)),
            pl.BlockSpec((1, Cp), lambda i: (0, 0)),
        ],
        out_specs=pl.BlockSpec((TB, Cp), lambda i: (i, 0)),
        compiler_params=pltpu.CompilerParams(
            # Independent batch tiles -> shard across TCs on v7x; harmless on
            # v5e/v6e. VMEM use is tiny here (<0.5 MiB), so no vmem_limit_bytes
            # override is needed even with much larger TB.
            dimension_semantics=("parallel",)),
    )(x_p, w1_p, b1_p, w2_p, b2_p)

    # Strip the batch / class padding.
    return out_p[:B, :C]


if __name__ == "__main__":
    # Small shapes consistent with the module; batch chosen so the grid has
    # multiple steps (256 / TB=128 -> 2 grid iterations) to exercise pipelining.
    B, INPUT, HIDDEN, CLASSES = 256, 32, 64, 16

    key = jax.random.PRNGKey(0)
    kx, kw1, kb1, kw2, kb2 = jax.random.split(key, 5)

    x = jax.random.normal(kx, (B, INPUT), dtype=jnp.float32)
    # Deterministic parameter init (PyTorch-style uniform bounds, synthetic).
    bound1 = 1.0 / (INPUT ** 0.5)
    w1 = jax.random.uniform(kw1, (INPUT, HIDDEN), jnp.float32, -bound1, bound1)
    b1 = jax.random.uniform(kb1, (1, HIDDEN), jnp.float32, -bound1, bound1)
    bound2 = 1.0 / (HIDDEN ** 0.5)
    w2 = jax.random.uniform(kw2, (HIDDEN, CLASSES), jnp.float32, -bound2, bound2)
    b2 = jax.random.uniform(kb2, (1, CLASSES), jnp.float32, -bound2, bound2)

    out = feed_forward_net(x, w1, b1, w2, b2)
    out = jax.block_until_ready(out)

    # Reference in plain JAX using the same bf16-rounded inputs (f32 math).
    xr = x.astype(jnp.bfloat16).astype(jnp.float32)
    w1r = w1.astype(jnp.bfloat16).astype(jnp.float32)
    w2r = w2.astype(jnp.bfloat16).astype(jnp.float32)
    ref = jnp.maximum(xr @ w1r + b1, 0.0) @ w2r + b2

    assert out.shape == (B, CLASSES)
    # bf16 activation recast before fc2 -> loosen tolerance vs. pure-f32 ref.
    assert jnp.allclose(out, ref, atol=5e-2, rtol=5e-2)

    print("KERNEL_OK")
</pallas_src>

<mosaic_0001>
module attributes {stable_mosaic.version = 11 : i64} {
  func.func @_mlp_kernel(%arg0: i32, %arg1: memref<128x128xbf16, #tpu.memory_space<vmem>>, %arg2: memref<128x128xbf16, #tpu.memory_space<vmem>>, %arg3: memref<1x128xf32, #tpu.memory_space<vmem>>, %arg4: memref<128x128xbf16, #tpu.memory_space<vmem>>, %arg5: memref<1x128xf32, #tpu.memory_space<vmem>>, %arg6: memref<128x128xf32, #tpu.memory_space<vmem>>) attributes {dimension_semantics = [#tpu.dimension_semantics<parallel>], iteration_bounds = array<i64: 2>, scalar_prefetch = 0 : i64, scratch_operands = 0 : i64, tpu.core_type = #tpu.core_type<tc>, window_params = [{transform_indices = @transform_0, window_bounds = array<i64: 128, 128>}, {pipeline_mode = #tpu.pipeline_mode<synchronous>, transform_indices = @transform_1, window_bounds = array<i64: 128, 128>}, {pipeline_mode = #tpu.pipeline_mode<synchronous>, transform_indices = @transform_2, window_bounds = array<i64: 1, 128>}, {pipeline_mode = #tpu.pipeline_mode<synchronous>, transform_indices = @transform_3, window_bounds = array<i64: 128, 128>}, {pipeline_mode = #tpu.pipeline_mode<synchronous>, transform_indices = @transform_4, window_bounds = array<i64: 1, 128>}, {transform_indices = @transform_5, window_bounds = array<i64: 128, 128>}]} {
    %c0 = arith.constant 0 : index
    %c0_0 = arith.constant 0 : index
    %0 = vector.load %arg1[%c0, %c0_0] : memref<128x128xbf16, #tpu.memory_space<vmem>>, vector<128x128xbf16>
    %c0_1 = arith.constant 0 : index
    %c0_2 = arith.constant 0 : index
    %1 = vector.load %arg2[%c0_1, %c0_2] : memref<128x128xbf16, #tpu.memory_space<vmem>>, vector<128x128xbf16>
    %cst = arith.constant dense<0.000000e+00> : vector<128x128xf32>
    %2 = tpu.matmul %0, %1, %cst {dimension_numbers = #tpu.dot_dimension_numbers<[1], [0], [0], [1], [0, 0, 1, 1], [], []>} : vector<128x128xbf16>, vector<128x128xbf16>, vector<128x128xf32> -> vector<128x128xf32>
    %c0_3 = arith.constant 0 : index
    %c0_4 = arith.constant 0 : index
    %3 = vector.load %arg3[%c0_3, %c0_4] : memref<1x128xf32, #tpu.memory_space<vmem>>, vector<1x128xf32>
    %4 = vector.broadcast %3 : vector<1x128xf32> to vector<128x128xf32>
    %5 = arith.addf %2, %4 : vector<128x128xf32>
    %cst_5 = arith.constant 0.000000e+00 : f32
    %6 = vector.broadcast %cst_5 : f32 to vector<128x128xf32>
    %7 = arith.maximumf %5, %6 : vector<128x128xf32>
    %8 = arith.truncf %7 : vector<128x128xf32> to vector<128x128xbf16>
    %c0_6 = arith.constant 0 : index
    %c0_7 = arith.constant 0 : index
    %9 = vector.load %arg4[%c0_6, %c0_7] : memref<128x128xbf16, #tpu.memory_space<vmem>>, vector<128x128xbf16>
    %cst_8 = arith.constant dense<0.000000e+00> : vector<128x128xf32>
    %10 = tpu.matmul %8, %9, %cst_8 {dimension_numbers = #tpu.dot_dimension_numbers<[1], [0], [0], [1], [0, 0, 1, 1], [], []>} : vector<128x128xbf16>, vector<128x128xbf16>, vector<128x128xf32> -> vector<128x128xf32>
    %c0_9 = arith.constant 0 : index
    %c0_10 = arith.constant 0 : index
    %11 = vector.load %arg5[%c0_9, %c0_10] : memref<1x128xf32, #tpu.memory_space<vmem>>, vector<1x128xf32>
    %12 = vector.broadcast %11 : vector<1x128xf32> to vector<128x128xf32>
    %13 = arith.addf %10, %12 : vector<128x128xf32>
    %c0_11 = arith.constant 0 : index
    %c0_12 = arith.constant 0 : index
    %14 = vector.load %arg6[%c0_11, %c0_12] : memref<128x128xf32, #tpu.memory_space<vmem>>, vector<128x128xf32>
    tpu.vector_store %arg6[%c0_11, %c0_12], %13 {strides = array<i32>} : memref<128x128xf32, #tpu.memory_space<vmem>>, vector<128x128xf32>,
    return
  }
  func.func @transform_0(%arg0: i32) -> (i32, i32) {
    %c0_i32 = arith.constant 0 : i32
    %c0_i32_0 = arith.constant 0 : i32
    return %arg0, %c0_i32 : i32, i32
  }
  func.func @transform_1(%arg0: i32) -> (i32, i32) {
    %c0_i32 = arith.constant 0 : i32
    %c0_i32_0 = arith.constant 0 : i32
    %c0_i32_1 = arith.constant 0 : i32
    return %c0_i32, %c0_i32_0 : i32, i32
  }
  func.func @transform_2(%arg0: i32) -> (i32, i32) {
    %c0_i32 = arith.constant 0 : i32
    %c0_i32_0 = arith.constant 0 : i32
    %c0_i32_1 = arith.constant 0 : i32
    return %c0_i32, %c0_i32_0 : i32, i32
  }
  func.func @transform_3(%arg0: i32) -> (i32, i32) {
    %c0_i32 = arith.constant 0 : i32
    %c0_i32_0 = arith.constant 0 : i32
    %c0_i32_1 = arith.constant 0 : i32
    return %c0_i32, %c0_i32_0 : i32, i32
  }
  func.func @transform_4(%arg0: i32) -> (i32, i32) {
    %c0_i32 = arith.constant 0 : i32
    %c0_i32_0 = arith.constant 0 : i32
    %c0_i32_1 = arith.constant 0 : i32
    return %c0_i32, %c0_i32_0 : i32, i32
  }
  func.func @transform_5(%arg0: i32) -> (i32, i32) {
    %c0_i32 = arith.constant 0 : i32
    %c0_i32_0 = arith.constant 0 : i32
    return %arg0, %c0_i32 : i32, i32
  }
}

</mosaic_0001>

<llo_original>
// kernel: feed_forward_net.1
$region0: #{feed_forward_net.1}
  #allocation0 [shape = 'u32[]', space=smem, size = 0x4, offset = 0x4, fixed_abs, tag = 'smem constant byte address 0x4 - core index']
  #allocation1 [shape = 'u32[72,128]{1,0:T(1,128)}', space=vmem, size = 0x9000, scoped, tag = 'internal scratch']
  %s0 = inlined_call_operand.vmem [shape: bf16[256,128], index: 0, kind: input, shape index: {}]
  %s1 = inlined_call_operand.vmem [shape: bf16[128,128], index: 1, kind: input, shape index: {}]
  %s2 = inlined_call_operand.vmem [shape: f32[1,128], index: 2, kind: input, shape index: {}]
  %s3 = inlined_call_operand.vmem [shape: bf16[128,128], index: 3, kind: input, shape index: {}]
  %s4 = inlined_call_operand.vmem [shape: f32[1,128], index: 4, kind: input, shape index: {}]
  %s5 = inlined_call_operand.vmem [shape: f32[256,128], index: 5, kind: output, shape index: {}]
  %s6 = sld [smem:[#allocation0]]
  $region53: #{feed_forward_net.1} parent=0
    _
  %s8 = ssub.s32 1, %s6
  %s9 = scalar_select 0, %s8, %s6
  loop: start=0, step=1, limit=4
  $region2: #{feed_forward_net.1} parent=0 // loop_pre_header
    _
  $region3: #{feed_forward_net.1} parent=0 // loop_header
    %s11 = sphi 0, %s15
    %p12 = scmp.ge.s32.totalorder %s11, 4
    %s21 = sphi 0, %s23
    %s24 = sphi 0, %s21
    %s25 = sphi 0, %s24
    %s41 = sphi 0, %s25
    %s45 = sphi 0, %s45
    %s47 = sphi 0, %s45
    %s48 = sphi 0, %s47
    %s62 = sphi 0, %s48
    %s66 = sphi 0, %s66
    %s68 = sphi 0, %s66
    %s69 = sphi 0, %s68
    %s83 = sphi 0, %s69
    %s87 = sphi 0, %s87
    %s89 = sphi 0, %s87
    %s90 = sphi 0, %s89
    %s104 = sphi 0, %s90
    %s108 = sphi 0, %s108
    %s110 = sphi 0, %s108
    %s111 = sphi 0, %s110
    %s125 = sphi 0, %s111
    %s131 = sphi 0, %s133
    %s134 = sphi 0, %s131
    %s135 = sphi 0, %s134
    %s151 = sphi 0, %s135
  $region4: #{feed_forward_net.1} parent=0 // loop_header_branch
    %14 = sbr.rel (%p12) target = $region8
  $region5: #{feed_forward_net.1} parent=0 // loop_body
    %s16 = ssub.s32 %s11, 1
    %s17 = ssub.s32 %s11, 2
    %s18 = sadd.s32 %s11, 1
    %s19 = ssub.s32 %s11, %s18
    %p20 = scmp.eq.s32.totalorder %s19, 0
    %s22 = sadd.s32 %s21, 1
    %s23 = scalar_select %p20, %s21, %s22
    %p26 = pneg %p20
    %p27 = scmp.eq.s32.totalorder %s11, 1
    %p28 = por %p26, %p27
    %p29 = scmp.ne.s32.totalorder %s21, %s24
    %p30 = scmp.eq.s32.totalorder %s11, 0
    %p31 = por %p29, %p30
    %p32 = scmp.ne.s32.totalorder %s21, %s24
    %p33 = scmp.eq.s32.totalorder %s16, 1
    %p34 = por %p32, %p33
    %p35 = scmp.ne.s32.totalorder %s24, %s25
    %p36 = scmp.eq.s32.totalorder %s16, 0
    %p37 = por %p35, %p36
    %p38 = scmp.ne.s32.totalorder %s24, %s25
    %p39 = scmp.eq.s32.totalorder %s17, 1
    %p40 = por %p38, %p39
    %p42 = scmp.ne.s32.totalorder %s25, %s41
    %p43 = scmp.eq.s32.totalorder %s17, 0
    %p44 = por %p42, %p43
    %s46 = sadd.s32 %s45, 1
    %p49 = scmp.eq.s32.totalorder %s11, 1
    %p50 = scmp.ne.s32.totalorder %s45, %s47
    %p51 = scmp.eq.s32.totalorder %s11, 0
    %p52 = por %p50, %p51
    %p53 = scmp.ne.s32.totalorder %s45, %s47
    %p54 = scmp.eq.s32.totalorder %s16, 1
    %p55 = por %p53, %p54
    %p56 = scmp.ne.s32.totalorder %s47, %s48
    %p57 = scmp.eq.s32.totalorder %s16, 0
    %p58 = por %p56, %p57
    %p59 = scmp.ne.s32.totalorder %s47, %s48
    %p60 = scmp.eq.s32.totalorder %s17, 1
    %p61 = por %p59, %p60
    %p63 = scmp.ne.s32.totalorder %s48, %s62
    %p64 = scmp.eq.s32.totalorder %s17, 0
    %p65 = por %p63, %p64
    %s67 = sadd.s32 %s66, 1
    %p70 = scmp.eq.s32.totalorder %s11, 1
    %p71 = scmp.ne.s32.totalorder %s66, %s68
    %p72 = scmp.eq.s32.totalorder %s11, 0
    %p73 = por %p71, %p72
    %p74 = scmp.ne.s32.totalorder %s66, %s68
    %p75 = scmp.eq.s32.totalorder %s16, 1
    %p76 = por %p74, %p75
    %p77 = scmp.ne.s32.totalorder %s68, %s69
    %p78 = scmp.eq.s32.totalorder %s16, 0
    %p79 = por %p77, %p78
    %p80 = scmp.ne.s32.totalorder %s68, %s69
    %p81 = scmp.eq.s32.totalorder %s17, 1
    %p82 = por %p80, %p81
    %p84 = scmp.ne.s32.totalorder %s69, %s83
    %p85 = scmp.eq.s32.totalorder %s17, 0
    %p86 = por %p84, %p85
    %s88 = sadd.s32 %s87, 1
    %p91 = scmp.eq.s32.totalorder %s11, 1
    %p92 = scmp.ne.s32.totalorder %s87, %s89
    %p93 = scmp.eq.s32.totalorder %s11, 0
    %p94 = por %p92, %p93
    %p95 = scmp.ne.s32.totalorder %s87, %s89
    %p96 = scmp.eq.s32.totalorder %s16, 1
    %p97 = por %p95, %p96
    %p98 = scmp.ne.s32.totalorder %s89, %s90
    %p99 = scmp.eq.s32.totalorder %s16, 0
    %p100 = por %p98, %p99
    %p101 = scmp.ne.s32.totalorder %s89, %s90
    %p102 = scmp.eq.s32.totalorder %s17, 1
    %p103 = por %p101, %p102
    %p105 = scmp.ne.s32.totalorder %s90, %s104
    %p106 = scmp.eq.s32.totalorder %s17, 0
    %p107 = por %p105, %p106
    %s109 = sadd.s32 %s108, 1
    %p112 = scmp.eq.s32.totalorder %s11, 1
    %p113 = scmp.ne.s32.totalorder %s108, %s110
    %p114 = scmp.eq.s32.totalorder %s11, 0
    %p115 = por %p113, %p114
    %p116 = scmp.ne.s32.totalorder %s108, %s110
    %p117 = scmp.eq.s32.totalorder %s16, 1
    %p118 = por %p116, %p117
    %p119 = scmp.ne.s32.totalorder %s110, %s111
    %p120 = scmp.eq.s32.totalorder %s16, 0
    %p121 = por %p119, %p120
    %p122 = scmp.ne.s32.totalorder %s110, %s111
    %p123 = scmp.eq.s32.totalorder %s17, 1
    %p124 = por %p122, %p123
    %p126 = scmp.ne.s32.totalorder %s111, %s125
    %p127 = scmp.eq.s32.totalorder %s17, 0
    %p128 = por %p126, %p127
    %s129 = ssub.s32 %s11, %s18
    %p130 = scmp.eq.s32.totalorder %s129, 0
    %s132 = sadd.s32 %s131, 1
    %s133 = scalar_select %p130, %s131, %s132
    %p136 = pneg %p130
    %p137 = scmp.eq.s32.totalorder %s11, 1
    %p138 = por %p136, %p137
    %p139 = scmp.ne.s32.totalorder %s131, %s134
    %p140 = scmp.eq.s32.totalorder %s11, 0
    %p141 = por %p139, %p140
    %p142 = scmp.ne.s32.totalorder %s131, %s134
    %p143 = scmp.eq.s32.totalorder %s16, 1
    %p144 = por %p142, %p143
    %p145 = scmp.ne.s32.totalorder %s134, %s135
    %p146 = scmp.eq.s32.totalorder %s16, 0
    %p147 = por %p145, %p146
    %p148 = scmp.ne.s32.totalorder %s134, %s135
    %p149 = scmp.eq.s32.totalorder %s17, 1
    %p150 = por %p148, %p149
    %p152 = scmp.ne.s32.totalorder %s135, %s151
    %p153 = scmp.eq.s32.totalorder %s17, 0
    %p154 = por %p152, %p153
    %p155 = scmp.le.s32.totalorder 1, %s11
    %p156 = scmp.lt.s32.totalorder %s11, 3
    %p157 = pnand %p155, %p156
    %p158 = pneg %p157
    // Predicated region
    $region9: #{feed_forward_net.1} parent=5 // pred_check
      _
    $region10: #{feed_forward_net.1} parent=5 // pred_check_branch
      %160 = sbr.rel (%p157) target = $region12
    $region11: #{feed_forward_net.1} parent=5 // pred_region
      %s161 = ssub.s32 %s11, 1
      // Predicated region
      $region13: #{feed_forward_net.1} parent=11 // pred_check
        %p162 = pneg %p58
      $region14: #{feed_forward_net.1} parent=11 // pred_check_branch
        %164 = sbr.rel (%p162) target = $region16
      $region15: #{feed_forward_net.1} parent=11 // pred_region
        _
      $region16: #{feed_forward_net.1} parent=11 // pred_fallthru
        _
      // Predicated region
      $region17: #{feed_forward_net.1} parent=11 // pred_check
        %p165 = pneg %p79
      $region18: #{feed_forward_net.1} parent=11 // pred_check_branch
        %167 = sbr.rel (%p165) target = $region20
      $region19: #{feed_forward_net.1} parent=11 // pred_region
        _
      $region20: #{feed_forward_net.1} parent=11 // pred_fallthru
        _
      // Predicated region
      $region21: #{feed_forward_net.1} parent=11 // pred_check
        %p168 = pneg %p100
      $region22: #{feed_forward_net.1} parent=11 // pred_check_branch
        %170 = sbr.rel (%p168) target = $region24
      $region23: #{feed_forward_net.1} parent=11 // pred_region
        _
      $region24: #{feed_forward_net.1} parent=11 // pred_fallthru
        _
      // Predicated region
      $region25: #{feed_forward_net.1} parent=11 // pred_check
        %p171 = pneg %p121
      $region26: #{feed_forward_net.1} parent=11 // pred_check_branch
        %173 = sbr.rel (%p171) target = $region28
      $region27: #{feed_forward_net.1} parent=11 // pred_region
        _
      $region28: #{feed_forward_net.1} parent=11 // pred_fallthru
        _
    $region12: #{feed_forward_net.1} parent=5 // pred_fallthru
      _
    %p174 = scmp.lt.s32.totalorder %s11, 2
    // Predicated region
    $region29: #{feed_forward_net.1} parent=5 // pred_check
      %p175 = pneg %p174
    $region30: #{feed_forward_net.1} parent=5 // pred_check_branch
      %177 = sbr.rel (%p175) target = $region32
    $region31: #{feed_forward_net.1} parent=5 // pred_region
      // Predicated region
      $region33: #{feed_forward_net.1} parent=31 // pred_check
        %p178 = pneg %p31
      $region34: #{feed_forward_net.1} parent=31 // pred_check_branch
        %180 = sbr.rel (%p178) target = $region36
      $region35: #{feed_forward_net.1} parent=31 // pred_region
        %s181 = smul.u32 16, %s11
        %p182 = scmp.lt.s32.totalorder %s181, 31
        %s183 = scalar_select %p182, %s181, 31
        %s184 = smul.addr %s183, 4
        %s185 = scalar_lea.vmem %s0, %s184
        %s186 = smul.u32 16, %s11
      $region36: #{feed_forward_net.1} parent=31 // pred_fallthru
        _
    $region32: #{feed_forward_net.1} parent=5 // pred_fallthru
      _
    %p187 = scmp.le.s32.totalorder 1, %s11
    %p188 = scmp.lt.s32.totalorder %s11, 3
    %p189 = pnand %p187, %p188
    %p190 = pneg %p189
    // Predicated region
    $region37: #{feed_forward_net.1} parent=5 // pred_check
      _
    $region38: #{feed_forward_net.1} parent=5 // pred_check_branch
      %192 = sbr.rel (%p189) target = $region40
    $region39: #{feed_forward_net.1} parent=5 // pred_region
      %s193 = ssub.s32 %s11, 1
      %s194 = smul.u32 16, %s16
      %p195 = scmp.lt.s32.totalorder %s194, 31
      %s196 = scalar_select %p195, %s194, 31
      %s197 = smul.addr %s196, 4
      %s198 = scalar_lea.vmem %s0, %s197
      %p199 = pneg %p37
      %p200 = pneg %p34
      %p201 = pneg %p58
      %p202 = pneg %p55
      %p203 = pneg %p79
      %p204 = pneg %p76
      %p205 = pneg %p100
      %p206 = pneg %p97
      %p207 = pneg %p121
      %p208 = pneg %p118
      %p209 = pneg %p147
      %p210 = pneg %p144
      %s211 = smul.u32 16, %s16
      %p212 = scmp.lt.s32.totalorder %s211, 31
      %s213 = scalar_select %p212, %s211, 31
      %s214 = smul.addr %s213, 8
      %s215 = scalar_lea.vmem %s5, %s214
      %s216 = smul.u32 16, %s16
      %p217 = scmp.lt.s32.totalorder %s216, 31
      %s218 = scalar_select %p217, %s216, 31
      %s219 = smul.addr %s218, 4
      %s220 = scalar_lea.vmem %s0, %s219
      %s221 = smul.u32 16, %s16
      %s222 = smul.u32 16, %s16
      %p223 = scmp.lt.s32.totalorder %s222, 31
      %s224 = scalar_select %p223, %s222, 31
      %s225 = smul.addr %s224, 8
      %s226 = scalar_lea.vmem %s5, %s225
      %s227 = smul.u32 16, %s16
      %v228 = vld [vmem:[%s220] sm:$0xf]
      %v229 = vld [vmem:[%s220 + $0x4] sm:$0xf]
      %v230 = vld [vmem:[%s220 + $0x8] sm:$0xf]
      %v231 = vld [vmem:[%s220 + $0xc] sm:$0xf]
      %v232 = vld [vmem:[%s220 + $0x10] sm:$0xf]
      %v233 = vld [vmem:[%s220 + $0x14] sm:$0xf]
      %v234 = vld [vmem:[%s220 + $0x18] sm:$0xf]
      %v235 = vld [vmem:[%s220 + $0x1c] sm:$0xf]
      %v236 = vld [vmem:[%s220 + $0x20] sm:$0xf]
      %v237 = vld [vmem:[%s220 + $0x24] sm:$0xf]
      %v238 = vld [vmem:[%s220 + $0x28] sm:$0xf]
      %v239 = vld [vmem:[%s220 + $0x2c] sm:$0xf]
      %v240 = vld [vmem:[%s220 + $0x30] sm:$0xf]
      %v241 = vld [vmem:[%s220 + $0x34] sm:$0xf]
      %v242 = vld [vmem:[%s220 + $0x38] sm:$0xf]
      %v243 = vld [vmem:[%s220 + $0x3c] sm:$0xf]
      %v244 = vld [vmem:[%s1] sm:$0xf]
      %v245 = vld [vmem:[%s1 + $0x4] sm:$0xf]
      %v246 = vld [vmem:[%s1 + $0x8] sm:$0xf]
      %v247 = vld [vmem:[%s1 + $0xc] sm:$0xf]
      %v248 = vld [vmem:[%s1 + $0x10] sm:$0xf]
      %v249 = vld [vmem:[%s1 + $0x14] sm:$0xf]
      %v250 = vld [vmem:[%s1 + $0x18] sm:$0xf]
      %v251 = vld [vmem:[%s1 + $0x1c] sm:$0xf]
      %v252 = vld [vmem:[%s1 + $0x20] sm:$0xf]
      %v253 = vld [vmem:[%s1 + $0x24] sm:$0xf]
      %v254 = vld [vmem:[%s1 + $0x28] sm:$0xf]
      %v255 = vld [vmem:[%s1 + $0x2c] sm:$0xf]
      %v256 = vld [vmem:[%s1 + $0x30] sm:$0xf]
      %v257 = vld [vmem:[%s1 + $0x34] sm:$0xf]
      %v258 = vld [vmem:[%s1 + $0x38] sm:$0xf]
      %v259 = vld [vmem:[%s1 + $0x3c] sm:$0xf]
      %v260 = vld [vmem:[%s2] sm:$0x1]
      %v262 = vperm.slane %v260, 0
      %v280 = vunpack.c.l.b16 %v228
      %v281 = vunpack.c.l.b16 %v229
      %v282 = vunpack.c.l.b16 %v230
      %v283 = vunpack.c.l.b16 %v231
      %v284 = vunpack.c.l.b16 %v232
      %v285 = vunpack.c.l.b16 %v233
      %v286 = vunpack.c.l.b16 %v234
      %v287 = vunpack.c.l.b16 %v235
      %v288 = vunpack.c.l.b16 %v236
      %v289 = vunpack.c.l.b16 %v237
      %v290 = vunpack.c.l.b16 %v238
      %v291 = vunpack.c.l.b16 %v239
      %v292 = vunpack.c.l.b16 %v240
      %v293 = vunpack.c.l.b16 %v241
      %v294 = vunpack.c.l.b16 %v242
      %v295 = vunpack.c.l.b16 %v243
      %v296 = vpack.c.b16 %v281, %v280
      %v297 = vpack.c.b16 %v283, %v282
      %v298 = vpack.c.b16 %v285, %v284
      %v299 = vpack.c.b16 %v287, %v286
      %v300 = vpack.c.b16 %v289, %v288
      %v301 = vpack.c.b16 %v291, %v290
      %v302 = vpack.c.b16 %v293, %v292
      %v303 = vpack.c.b16 %v295, %v294
      %v328 = vunpack.c.l.b16 %v244
      %v329 = vunpack.c.l.b16 %v245
      %v330 = vunpack.c.l.b16 %v246
      %v331 = vunpack.c.l.b16 %v247
      %v332 = vunpack.c.l.b16 %v248
      %v333 = vunpack.c.l.b16 %v249
      %v334 = vunpack.c.l.b16 %v250
      %v335 = vunpack.c.l.b16 %v251
      %v336 = vunpack.c.l.b16 %v252
      %v337 = vunpack.c.l.b16 %v253
      %v338 = vunpack.c.l.b16 %v254
      %v339 = vunpack.c.l.b16 %v255
      %v340 = vunpack.c.l.b16 %v256
      %v341 = vunpack.c.l.b16 %v257
      %v342 = vunpack.c.l.b16 %v258
      %v343 = vunpack.c.l.b16 %v259
      %v344 = vpack.c.b16 %v329, %v328
      %v345 = vpack.c.b16 %v331, %v330
      %v346 = vpack.c.b16 %v333, %v332
      %v347 = vpack.c.b16 %v335, %v334
      %v348 = vpack.c.b16 %v337, %v336
      %v349 = vpack.c.b16 %v339, %v338
      %v350 = vpack.c.b16 %v341, %v340
      %v351 = vpack.c.b16 %v343, %v342
      %360 = vmatpush.bf16.msra.mxu0 %v351
      %361 = vmatpush.bf16.msra.mxu0 %v350
      %362 = vmatpush.bf16.msra.mxu0 %v349
      %363 = vmatpush.bf16.msra.mxu0 %v348
      %364 = vmatpush.bf16.msra.mxu0 %v347
      %365 = vmatpush.bf16.msra.mxu0 %v346
      %366 = vmatpush.bf16.msra.mxu0 %v345
      %367 = vmatpush.bf16.msra.mxu0 %v344
      %368 = vmatmul.bf16.gmra.mxu0 %v296
      %v369 = vpop.f32.mrf.mxu0
      %v370 = vadd.f32 %v262, %v369
      %v371 = vpop.f32.mrf.mxu0
      %v372 = vadd.f32 %v262, %v371
      %373 = vmatmul.bf16.gmra.mxu0 %v297
      %v374 = vpop.f32.mrf.mxu0
      %v375 = vadd.f32 %v262, %v374
      %v376 = vpop.f32.mrf.mxu0
      %v377 = vadd.f32 %v262, %v376
      %378 = vmatmul.bf16.gmra.mxu0 %v298
      %v379 = vpop.f32.mrf.mxu0
      %v380 = vadd.f32 %v262, %v379
      %v381 = vpop.f32.mrf.mxu0
      %v382 = vadd.f32 %v262, %v381
      %383 = vmatmul.bf16.gmra.mxu0 %v299
      %v384 = vpop.f32.mrf.mxu0
      %v385 = vadd.f32 %v262, %v384
      %v386 = vpop.f32.mrf.mxu0
      %v387 = vadd.f32 %v262, %v386
      %388 = vmatmul.bf16.gmra.mxu0 %v300
      %v389 = vpop.f32.mrf.mxu0
      %v390 = vadd.f32 %v262, %v389
      %v391 = vpop.f32.mrf.mxu0
      %v392 = vadd.f32 %v262, %v391
      %393 = vmatmul.bf16.gmra.mxu0 %v301
      %v394 = vpop.f32.mrf.mxu0
      %v395 = vadd.f32 %v262, %v394
      %v396 = vpop.f32.mrf.mxu0
      %v397 = vadd.f32 %v262, %v396
      %398 = vmatmul.bf16.gmra.mxu0 %v302
      %v399 = vpop.f32.mrf.mxu0
      %v400 = vadd.f32 %v262, %v399
      %v401 = vpop.f32.mrf.mxu0
      %v402 = vadd.f32 %v262, %v401
      %403 = vmatmul.bf16.gmra.mxu0 %v303
      %v404 = vpop.f32.mrf.mxu0
      %v405 = vadd.f32 %v262, %v404
      %v406 = vpop.f32.mrf.mxu0
      %v407 = vadd.f32 %v262, %v406
      %408 = vdwg.mxu0
      %v409 = vmax.f32 %v370, 0.0
      %v410 = vmax.f32 %v372, 0.0
      %v411 = vmax.f32 %v375, 0.0
      %v412 = vmax.f32 %v377, 0.0
      %v413 = vmax.f32 %v380, 0.0
      %v414 = vmax.f32 %v382, 0.0
      %v415 = vmax.f32 %v385, 0.0
      %v416 = vmax.f32 %v387, 0.0
      %v417 = vmax.f32 %v390, 0.0
      %v418 = vmax.f32 %v392, 0.0
      %v419 = vmax.f32 %v395, 0.0
      %v420 = vmax.f32 %v397, 0.0
      %v421 = vmax.f32 %v400, 0.0
      %v422 = vmax.f32 %v402, 0.0
      %v423 = vmax.f32 %v405, 0.0
      %v424 = vmax.f32 %v407, 0.0
      %v425 = vpack.c.bf16 %v410, %v409
      %v426 = vpack.c.bf16 %v412, %v411
      %v427 = vpack.c.bf16 %v414, %v413
      %v428 = vpack.c.bf16 %v416, %v415
      %v429 = vpack.c.bf16 %v418, %v417
      %v430 = vpack.c.bf16 %v420, %v419
      %v431 = vpack.c.bf16 %v422, %v421
      %v432 = vpack.c.bf16 %v424, %v423
      %v433 = vld [vmem:[%s3] sm:$0xf]
      %v434 = vld [vmem:[%s3 + $0x4] sm:$0xf]
      %v435 = vld [vmem:[%s3 + $0x8] sm:$0xf]
      %v436 = vld [vmem:[%s3 + $0xc] sm:$0xf]
      %v437 = vld [vmem:[%s3 + $0x10] sm:$0xf]
      %v438 = vld [vmem:[%s3 + $0x14] sm:$0xf]
      %v439 = vld [vmem:[%s3 + $0x18] sm:$0xf]
      %v440 = vld [vmem:[%s3 + $0x1c] sm:$0xf]
      %v441 = vld [vmem:[%s3 + $0x20] sm:$0xf]
      %v442 = vld [vmem:[%s3 + $0x24] sm:$0xf]
      %v443 = vld [vmem:[%s3 + $0x28] sm:$0xf]
      %v444 = vld [vmem:[%s3 + $0x2c] sm:$0xf]
      %v445 = vld [vmem:[%s3 + $0x30] sm:$0xf]
      %v446 = vld [vmem:[%s3 + $0x34] sm:$0xf]
      %v447 = vld [vmem:[%s3 + $0x38] sm:$0xf]
      %v448 = vld [vmem:[%s3 + $0x3c] sm:$0xf]
      %v449 = vld [vmem:[%s4] sm:$0x1]
      %v451 = vperm.slane %v449, 0
      %v469 = vunpack.c.l.b16 %v433
      %v470 = vunpack.c.l.b16 %v434
      %v471 = vunpack.c.l.b16 %v435
      %v472 = vunpack.c.l.b16 %v436
      %v473 = vunpack.c.l.b16 %v437
      %v474 = vunpack.c.l.b16 %v438
      %v475 = vunpack.c.l.b16 %v439
      %v476 = vunpack.c.l.b16 %v440
      %v477 = vunpack.c.l.b16 %v441
      %v478 = vunpack.c.l.b16 %v442
      %v479 = vunpack.c.l.b16 %v443
      %v480 = vunpack.c.l.b16 %v444
      %v481 = vunpack.c.l.b16 %v445
      %v482 = vunpack.c.l.b16 %v446
      %v483 = vunpack.c.l.b16 %v447
      %v484 = vunpack.c.l.b16 %v448
      %v485 = vpack.c.b16 %v470, %v469
      %v486 = vpack.c.b16 %v472, %v471
      %v487 = vpack.c.b16 %v474, %v473
      %v488 = vpack.c.b16 %v476, %v475
      %v489 = vpack.c.b16 %v478, %v477
      %v490 = vpack.c.b16 %v480, %v479
      %v491 = vpack.c.b16 %v482, %v481
      %v492 = vpack.c.b16 %v484, %v483
      %501 = vmatpush.bf16.msra.mxu0 %v492
      %502 = vmatpush.bf16.msra.mxu0 %v491
      %503 = vmatpush.bf16.msra.mxu0 %v490
      %504 = vmatpush.bf16.msra.mxu0 %v489
      %505 = vmatpush.bf16.msra.mxu0 %v488
      %506 = vmatpush.bf16.msra.mxu0 %v487
      %507 = vmatpush.bf16.msra.mxu0 %v486
      %508 = vmatpush.bf16.msra.mxu0 %v485
      %509 = vmatmul.bf16.gmra.mxu0 %v425
      %v510 = vpop.f32.mrf.mxu0
      %v511 = vadd.f32 %v451, %v510
      %v512 = vpop.f32.mrf.mxu0
      %v513 = vadd.f32 %v451, %v512
      %514 = vmatmul.bf16.gmra.mxu0 %v426
      %v515 = vpop.f32.mrf.mxu0
      %v516 = vadd.f32 %v451, %v515
      %v517 = vpop.f32.mrf.mxu0
      %v518 = vadd.f32 %v451, %v517
      %519 = vmatmul.bf16.gmra.mxu0 %v427
      %v520 = vpop.f32.mrf.mxu0
      %v521 = vadd.f32 %v451, %v520
      %v522 = vpop.f32.mrf.mxu0
      %v523 = vadd.f32 %v451, %v522
      %524 = vmatmul.bf16.gmra.mxu0 %v428
      %v525 = vpop.f32.mrf.mxu0
      %v526 = vadd.f32 %v451, %v525
      %v527 = vpop.f32.mrf.mxu0
      %v528 = vadd.f32 %v451, %v527
      %529 = vmatmul.bf16.gmra.mxu0 %v429
      %v530 = vpop.f32.mrf.mxu0
      %v531 = vadd.f32 %v451, %v530
      %v532 = vpop.f32.mrf.mxu0
      %v533 = vadd.f32 %v451, %v532
      %534 = vmatmul.bf16.gmra.mxu0 %v430
      %v535 = vpop.f32.mrf.mxu0
      %v536 = vadd.f32 %v451, %v535
      %v537 = vpop.f32.mrf.mxu0
      %v538 = vadd.f32 %v451, %v537
      %539 = vmatmul.bf16.gmra.mxu0 %v431
      %v540 = vpop.f32.mrf.mxu0
      %v541 = vadd.f32 %v451, %v540
      %v542 = vpop.f32.mrf.mxu0
      %v543 = vadd.f32 %v451, %v542
      %544 = vmatmul.bf16.gmra.mxu0 %v432
      %v545 = vpop.f32.mrf.mxu0
      %v546 = vadd.f32 %v451, %v545
      %v547 = vpop.f32.mrf.mxu0
      %v548 = vadd.f32 %v451, %v547
      %549 = vdwg.mxu0
      %550 = vst [vmem:[%s226] sm:$0xff] %v511
      %551 = vst [vmem:[%s226 + $0x8] sm:$0xff] %v513
      %552 = vst [vmem:[%s226 + $0x10] sm:$0xff] %v516
      %553 = vst [vmem:[%s226 + $0x18] sm:$0xff] %v518
      %554 = vst [vmem:[%s226 + $0x20] sm:$0xff] %v521
      %555 = vst [vmem:[%s226 + $0x28] sm:$0xff] %v523
      %556 = vst [vmem:[%s226 + $0x30] sm:$0xff] %v526
      %557 = vst [vmem:[%s226 + $0x38] sm:$0xff] %v528
      %558 = vst [vmem:[%s226 + $0x40] sm:$0xff] %v531
      %559 = vst [vmem:[%s226 + $0x48] sm:$0xff] %v533
      %560 = vst [vmem:[%s226 + $0x50] sm:$0xff] %v536
      %561 = vst [vmem:[%s226 + $0x58] sm:$0xff] %v538
      %562 = vst [vmem:[%s226 + $0x60] sm:$0xff] %v541
      %563 = vst [vmem:[%s226 + $0x68] sm:$0xff] %v543
      %564 = vst [vmem:[%s226 + $0x70] sm:$0xff] %v546
      %565 = vst [vmem:[%s226 + $0x78] sm:$0xff] %v548
      %s566 = smul.u32 16, %s16
      %p567 = scmp.lt.s32.totalorder %s566, 31
      %s568 = scalar_select %p567, %s566, 31
      %s569 = smul.addr %s568, 8
      %s570 = scalar_lea.vmem %s5, %s569
      // Predicated region
      $region41: #{feed_forward_net.1} parent=39 // pred_check
        %p571 = pneg %p144
      $region42: #{feed_forward_net.1} parent=39 // pred_check_branch
        %573 = sbr.rel (%p571) target = $region44
      $region43: #{feed_forward_net.1} parent=39 // pred_region
        %s574 = smul.u32 16, %s16
      $region44: #{feed_forward_net.1} parent=39 // pred_fallthru
        _
    $region40: #{feed_forward_net.1} parent=5 // pred_fallthru
      _
    %p575 = scmp.le.s32.totalorder 2, %s11
    // Predicated region
    $region45: #{feed_forward_net.1} parent=5 // pred_check
      %p576 = pneg %p575
    $region46: #{feed_forward_net.1} parent=5 // pred_check_branch
      %578 = sbr.rel (%p576) target = $region48
    $region47: #{feed_forward_net.1} parent=5 // pred_region
      %s579 = ssub.s32 %s11, 2
      // Predicated region
      $region49: #{feed_forward_net.1} parent=47 // pred_check
        %p580 = pneg %p150
      $region50: #{feed_forward_net.1} parent=47 // pred_check_branch
        %582 = sbr.rel (%p580) target = $region52
      $region51: #{feed_forward_net.1} parent=47 // pred_region
        %s583 = smul.u32 16, %s17
        %p584 = scmp.lt.s32.totalorder %s583, 31
        %s585 = scalar_select %p584, %s583, 31
        %s586 = smul.addr %s585, 8
        %s587 = scalar_lea.vmem %s5, %s586
      $region52: #{feed_forward_net.1} parent=47 // pred_fallthru
        _
    $region48: #{feed_forward_net.1} parent=5 // pred_fallthru
      _
  $region6: #{feed_forward_net.1} parent=0 // loop_footer
    %s15 = sadd.s32 1, %s11
  $region7: #{feed_forward_net.1} parent=0 // loop_footer_branch
    %10 = sbr.rel target = $region3
  $region8: #{feed_forward_net.1} parent=0 // loop_exit
    _

</llo_original>
